<compile_context>
chip_gen: v7x
topology: tpu7x:2x2x1
jax: 0.10.0
libtpu: 0.0.40
codegen_flags: <defaults>
</compile_context>

<pallas_src>
import jax
import jax.numpy as jnp
from jax.experimental import pallas as pl
from jax.experimental.pallas import tpu as pltpu


def _bilinear_weight_matrix(out_size, crop_size, in_size, offset, dtype):
    """(out_size, in_size) matrix: bilinear resize of the window
    [offset, offset+crop_size) of a length-`in_size` axis to `out_size`
    samples (align_corners=False)."""
    scale = crop_size / out_size
    src = (jnp.arange(out_size, dtype=jnp.float32) + 0.5) * scale - 0.5
    src = jnp.clip(src, 0.0, crop_size - 1.0)
    i0 = jnp.floor(src).astype(jnp.int32)
    i1 = jnp.minimum(i0 + 1, crop_size - 1)
    frac = src - i0.astype(jnp.float32)
    cols = jnp.arange(in_size, dtype=jnp.int32)[None, :]
    w = (jnp.where(cols == (i0 + offset)[:, None], 1.0 - frac[:, None], 0.0)
         + jnp.where(cols == (i1 + offset)[:, None], frac[:, None], 0.0))
    return w.astype(dtype)


def _round_up(n, m):
    return ((n + m - 1) // m) * m


def _padded_vmem_bytes(rows, cols, itemsize):
    """Bytes one (rows, cols) buffer occupies in VMEM after (sublane, lane)
    tiling: lanes pad to 128, sublanes pad to the dtype packing tile."""
    sublane = {1: 32, 2: 16, 4: 8}.get(itemsize, 8)
    return _round_up(rows, sublane) * _round_up(cols, 128) * itemsize


def _pick_block_planes(planes, per_plane_block_bytes, vmem_ok):
    """Planes per grid step: largest divisor of `planes` whose padded input
    block stays under ~1 MB and whose VMEM footprint fits the budget,
    preferring >= 8 grid steps, then >= 2, then any."""
    divisors = [d for d in range(1, planes + 1) if planes % d == 0]
    target_bytes = 1 << 20
    for min_blocks in (8, 2, 1):
        good = [d for d in divisors
                if d * per_plane_block_bytes <= target_bytes
                and vmem_ok(d)
                and planes // d >= min_blocks]
        if good:
            return max(good)
    return 1


def random_crop_resize(x, key, crop_size, out_size):
    """x: (N, C, H, W). Random crop (one offset for the whole batched tensor,
    like torchvision RandomCrop on a batch), bilinear-resize back to
    (out_size, out_size). Returns (y, wy, wxt) with y: (N, C, out, out)."""
    N, C, H, W = x.shape
    planes = N * C

    in_dtype = x.dtype
    in_is_float = jnp.issubdtype(in_dtype, jnp.floating)
    # Weights in the input's floating dtype (bf16 stays bf16 -> full-rate MXU
    # on v5e); integer inputs are upcast to f32 and use f32 weights.
    w_dtype = (in_dtype if (in_is_float and jnp.dtype(in_dtype).itemsize < 4)
               else jnp.float32)

    kt, kl = jax.random.split(key)
    top = jax.random.randint(kt, (), 0, H - crop_size + 1)
    left = jax.random.randint(kl, (), 0, W - crop_size + 1)

    wy = _bilinear_weight_matrix(out_size, crop_size, H, top, w_dtype)      # (out, H)
    wxt = _bilinear_weight_matrix(out_size, crop_size, W, left, w_dtype).T  # (W, out)

    in_item = jnp.dtype(in_dtype).itemsize
    w_item = jnp.dtype(w_dtype).itemsize

    in_plane_b = _padded_vmem_bytes(H, W, in_item)
    out_plane_b = _padded_vmem_bytes(out_size, out_size, in_item)
    t_plane_b = _padded_vmem_bytes(H, out_size, 4)                 # f32 temp
    cast_plane_b = 0 if in_is_float else _padded_vmem_bytes(H, W, 4)
    weights_b = (_padded_vmem_bytes(out_size, H, w_item)
                 + _padded_vmem_bytes(W, out_size, w_item))

    try:
        vmem_cap = int(pltpu.get_tpu_info().vmem_capacity_bytes)
    except Exception:
        vmem_cap = 64 << 20                                        # v7x floor
    vmem_budget = int(vmem_cap * 0.75)                             # headroom

    def vmem_need(bp):
        # input + output double-buffered, weights counted 2x (allocation),
        # per-plane f32 intermediates / upcast copies counted per bp.
        return (2 * bp * (in_plane_b + out_plane_b)
                + bp * (t_plane_b + cast_plane_b)
                + 2 * weights_b)

    bp = _pick_block_planes(planes, in_plane_b,
                            lambda d: vmem_need(d) <= vmem_budget)
    num_blocks = planes // bp

    imgs = x.reshape(planes, H, W)                                 # free

    def kernel(img_ref, wy_ref, wxt_ref, out_ref):
        # img_ref : (bp, H, W)      native dtype
        # wy_ref  : (out, H)        row interpolation (crop offset folded in)
        # wxt_ref : (W, out)        column interpolation, transposed
        # out_ref : (bp, out, out)
        for b in range(bp):                                        # static
            xb = img_ref[b]
            if xb.dtype != wy_ref.dtype:                           # int -> f32
                xb = xb.astype(wy_ref.dtype)
            t = jnp.dot(xb, wxt_ref[...],
                        preferred_element_type=jnp.float32)        # (H, out)
            o = jnp.dot(wy_ref[...], t.astype(wy_ref.dtype),
                        preferred_element_type=jnp.float32)        # (out, out)
            if not in_is_float:
                info = jnp.iinfo(out_ref.dtype)
                o = jnp.clip(jnp.round(o), info.min, info.max)
            out_ref[b] = o.astype(out_ref.dtype)

    flops = 2 * planes * out_size * H * (W + out_size)
    bytes_accessed = (planes * H * W * in_item
                      + planes * out_size * out_size * in_item
                      + (out_size * H + W * out_size) * w_item)
    vmem_limit = int(min(max(2 * vmem_need(bp), 16 << 20), vmem_budget))

    out3 = pl.pallas_call(
        kernel,
        out_shape=jax.ShapeDtypeStruct((planes, out_size, out_size), in_dtype),
        grid_spec=pltpu.PrefetchScalarGridSpec(
            num_scalar_prefetch=0,
            grid=(num_blocks,),
            in_specs=[
                pl.BlockSpec((bp, H, W), lambda i: (i, 0, 0)),
                pl.BlockSpec((out_size, H), lambda i: (0, 0)),     # resident
                pl.BlockSpec((W, out_size), lambda i: (0, 0)),     # resident
            ],
            out_specs=pl.BlockSpec((bp, out_size, out_size),
                                   lambda i: (i, 0, 0)),
        ),
        compiler_params=pltpu.CompilerParams(
            dimension_semantics=("parallel",),
            vmem_limit_bytes=vmem_limit),
        cost_estimate=pl.CostEstimate(flops=flops, transcendentals=0,
                                      bytes_accessed=bytes_accessed),
    )(imgs, wy, wxt)

    # (planes, out, out) -> (N, C, out, out): pure metadata reshape, no
    # transpose / HBM round-trip.
    return out3.reshape(N, C, out_size, out_size), wy, wxt


if __name__ == "__main__":
    key = jax.random.PRNGKey(0)
    k_x, k_crop = jax.random.split(key)

    # Small-shape analogue of the module (original_image_size=16, crop=12).
    N, C, H, W = 2, 4, 16, 16
    CROP = 12
    OUT = 16

    x = jax.random.normal(k_x, (N, C, H, W), dtype=jnp.float32)

    y, wy, wxt = random_crop_resize(x, k_crop, CROP, OUT)
    y = jax.block_until_ready(y)

    # Reference: identical linear map computed with plain XLA.
    imgs = x.reshape(N * C, H, W).astype(jnp.float32)
    ref = jnp.einsum("oh,nhw,wp->nop", wy.astype(jnp.float32), imgs,
                     wxt.astype(jnp.float32)).reshape(N, C, OUT, OUT)
    assert y.shape == (N, C, OUT, OUT)
    assert jnp.allclose(y, ref, atol=1e-5, rtol=1e-5)

    print("KERNEL_OK")
</pallas_src>

<mosaic_0001>
module attributes {stable_mosaic.version = 11 : i64} {
  func.func @kernel(%arg0: i32, %arg1: memref<1x16x16xf32, #tpu.memory_space<vmem>>, %arg2: memref<16x16xf32, #tpu.memory_space<vmem>>, %arg3: memref<16x16xf32, #tpu.memory_space<vmem>>, %arg4: memref<1x16x16xf32, #tpu.memory_space<vmem>>) attributes {dimension_semantics = [#tpu.dimension_semantics<parallel>], iteration_bounds = array<i64: 8>, scalar_prefetch = 0 : i64, scratch_operands = 0 : i64, tpu.core_type = #tpu.core_type<tc>, window_params = [{transform_indices = @transform_0, window_bounds = array<i64: 1, 16, 16>}, {pipeline_mode = #tpu.pipeline_mode<synchronous>, transform_indices = @transform_1, window_bounds = array<i64: 16, 16>}, {pipeline_mode = #tpu.pipeline_mode<synchronous>, transform_indices = @transform_2, window_bounds = array<i64: 16, 16>}, {transform_indices = @transform_3, window_bounds = array<i64: 1, 16, 16>}]} {
    %c0 = arith.constant 0 : index
    %c0_0 = arith.constant 0 : index
    %c0_1 = arith.constant 0 : index
    %0 = vector.load %arg1[%c0, %c0_0, %c0_1] : memref<1x16x16xf32, #tpu.memory_space<vmem>>, vector<1x16x16xf32>
    %1 = vector.shape_cast %0 : vector<1x16x16xf32> to vector<16x16xf32>
    %c0_2 = arith.constant 0 : index
    %c0_3 = arith.constant 0 : index
    %2 = vector.load %arg3[%c0_2, %c0_3] : memref<16x16xf32, #tpu.memory_space<vmem>>, vector<16x16xf32>
    %cst = arith.constant dense<0.000000e+00> : vector<16x16xf32>
    %3 = tpu.matmul %1, %2, %cst {dimension_numbers = #tpu.dot_dimension_numbers<[1], [0], [0], [1], [0, 0, 1, 1], [], []>} : vector<16x16xf32>, vector<16x16xf32>, vector<16x16xf32> -> vector<16x16xf32>
    %c0_4 = arith.constant 0 : index
    %c0_5 = arith.constant 0 : index
    %4 = vector.load %arg2[%c0_4, %c0_5] : memref<16x16xf32, #tpu.memory_space<vmem>>, vector<16x16xf32>
    %cst_6 = arith.constant dense<0.000000e+00> : vector<16x16xf32>
    %5 = tpu.matmul %4, %3, %cst_6 {dimension_numbers = #tpu.dot_dimension_numbers<[1], [0], [0], [1], [0, 0, 1, 1], [], []>} : vector<16x16xf32>, vector<16x16xf32>, vector<16x16xf32> -> vector<16x16xf32>
    %c0_7 = arith.constant 0 : index
    %c0_8 = arith.constant 0 : index
    %c0_9 = arith.constant 0 : index
    %6 = vector.load %arg4[%c0_7, %c0_8, %c0_9] : memref<1x16x16xf32, #tpu.memory_space<vmem>>, vector<1x16x16xf32>
    %7 = vector.shape_cast %6 : vector<1x16x16xf32> to vector<16x16xf32>
    %8 = vector.shape_cast %5 : vector<16x16xf32> to vector<1x16x16xf32>
    tpu.vector_store %arg4[%c0_7, %c0_8, %c0_9], %8 {strides = array<i32>} : memref<1x16x16xf32, #tpu.memory_space<vmem>>, vector<1x16x16xf32>,
    return
  }
  func.func @transform_0(%arg0: i32) -> (i32, i32, i32) {
    %c0_i32 = arith.constant 0 : i32
    %c0_i32_0 = arith.constant 0 : i32
    %c0_i32_1 = arith.constant 0 : i32
    return %arg0, %c0_i32, %c0_i32_0 : i32, i32, i32
  }
  func.func @transform_1(%arg0: i32) -> (i32, i32) {
    %c0_i32 = arith.constant 0 : i32
    %c0_i32_0 = arith.constant 0 : i32
    %c0_i32_1 = arith.constant 0 : i32
    return %c0_i32, %c0_i32_0 : i32, i32
  }
  func.func @transform_2(%arg0: i32) -> (i32, i32) {
    %c0_i32 = arith.constant 0 : i32
    %c0_i32_0 = arith.constant 0 : i32
    %c0_i32_1 = arith.constant 0 : i32
    return %c0_i32, %c0_i32_0 : i32, i32
  }
  func.func @transform_3(%arg0: i32) -> (i32, i32, i32) {
    %c0_i32 = arith.constant 0 : i32
    %c0_i32_0 = arith.constant 0 : i32
    %c0_i32_1 = arith.constant 0 : i32
    return %arg0, %c0_i32, %c0_i32_0 : i32, i32, i32
  }
}

</mosaic_0001>

<llo_original>
// kernel: tpu_custom_call.1
$region0: #{tpu_custom_call.1}
  #allocation0 [shape = 'u32[]', space=smem, size = 0x4, offset = 0x4, fixed_abs, tag = 'smem constant byte address 0x4 - core index']
  #allocation1 [shape = 'u32[144,128]{1,0:T(1,128)}', space=vmem, size = 0x12000, scoped, tag = 'internal scratch']
  %s0 = inlined_call_operand.hbm [shape: f32[8,16,16], index: 0, kind: input, shape index: {}]
  %s1 = inlined_call_operand.hbm [shape: f32[16,16], index: 1, kind: input, shape index: {}]
  %s2 = inlined_call_operand.hbm [shape: f32[16,16], index: 2, kind: input, shape index: {}]
  %s3 = inlined_call_operand.hbm [shape: f32[8,16,16], index: 3, kind: output, shape index: {}]
  %s4 = sld [smem:[#allocation0]]
  $region57: #{tpu_custom_call.1} parent=0
    _
  %s6 = ssub.s32 1, %s4
  %s7 = scalar_select 0, %s6, %s4
  $region1: #{tpu_custom_call.1} parent=0
    #allocation2 [shape = 'u8[16384]{0}', space=vmem, size = 0x4000, scoped, tag = 'input window, operand 0']
    #allocation3 [shape = 's32[2]{0}', space=sflag, size = 0x8, scoped, tag = 'scoped memory for tpu_custom_call.1']
    #allocation4 [shape = 's32[2]{0}', space=sflag, size = 0x8, scoped, tag = 'scoped memory for tpu_custom_call.1']
    #allocation5 [shape = 'u8[8192]{0}', space=vmem, size = 0x2000, scoped, tag = 'input window, operand 1, single buffered']
    #allocation6 [shape = 's32[1]{0}', space=sflag, size = 0x4, scoped, tag = 'scoped memory for tpu_custom_call.1']
    #allocation7 [shape = 'u8[8192]{0}', space=vmem, size = 0x2000, scoped, tag = 'input window, operand 2, single buffered']
    #allocation8 [shape = 'u8[16384]{0}', space=vmem, size = 0x4000, scoped, tag = 'output window, operand 0']
    %8 = vsyncpa [#allocation3], 0
    %s9 = scalar_lea.sflag [#allocation3], 1
    %10 = vsyncpa %s9, 0
    %11 = vsyncpa [#allocation6], 0
    %12 = vsyncpa [#allocation4], 0
    %s13 = scalar_lea.sflag [#allocation4], 1
    %14 = vsyncpa %s13, 0
    loop: start=0, step=1, limit=10
    $region2: #{tpu_custom_call.1} parent=1 // loop_pre_header
      _
    $region3: #{tpu_custom_call.1} parent=1 // loop_header
      %s16 = sphi 0, %s20
      %p17 = scmp.ge.s32.totalorder %s16, 10
      %s26 = sphi 0, %s28
      %s29 = sphi 0, %s26
      %s30 = sphi 0, %s29
      %s46 = sphi 0, %s30
      %s50 = sphi 0, %s50
      %s52 = sphi 0, %s50
      %s53 = sphi 0, %s52
      %s67 = sphi 0, %s53
      %s71 = sphi 0, %s71
      %s73 = sphi 0, %s71
      %s74 = sphi 0, %s73
      %s88 = sphi 0, %s74
      %s94 = sphi 0, %s96
      %s97 = sphi 0, %s94
      %s98 = sphi 0, %s97
      %s114 = sphi 0, %s98
    $region4: #{tpu_custom_call.1} parent=1 // loop_header_branch
      %19 = sbr.rel (%p17) target = $region8
    $region5: #{tpu_custom_call.1} parent=1 // loop_body
      %s21 = ssub.s32 %s16, 1
      %s22 = ssub.s32 %s16, 2
      %s23 = sadd.s32 %s16, 1
      %s24 = ssub.s32 %s16, %s23
      %p25 = scmp.eq.s32.totalorder %s24, 0
      %s27 = sadd.s32 %s26, 1
      %s28 = scalar_select %p25, %s26, %s27
      %p31 = pneg %p25
      %p32 = scmp.eq.s32.totalorder %s16, 7
      %p33 = por %p31, %p32
      %p34 = scmp.ne.s32.totalorder %s26, %s29
      %p35 = scmp.eq.s32.totalorder %s16, 0
      %p36 = por %p34, %p35
      %p37 = scmp.ne.s32.totalorder %s26, %s29
      %p38 = scmp.eq.s32.totalorder %s21, 7
      %p39 = por %p37, %p38
      %p40 = scmp.ne.s32.totalorder %s29, %s30
      %p41 = scmp.eq.s32.totalorder %s21, 0
      %p42 = por %p40, %p41
      %p43 = scmp.ne.s32.totalorder %s29, %s30
      %p44 = scmp.eq.s32.totalorder %s22, 7
      %p45 = por %p43, %p44
      %p47 = scmp.ne.s32.totalorder %s30, %s46
      %p48 = scmp.eq.s32.totalorder %s22, 0
      %p49 = por %p47, %p48
      %s51 = sadd.s32 %s50, 1
      %p54 = scmp.eq.s32.totalorder %s16, 7
      %p55 = scmp.ne.s32.totalorder %s50, %s52
      %p56 = scmp.eq.s32.totalorder %s16, 0
      %p57 = por %p55, %p56
      %p58 = scmp.ne.s32.totalorder %s50, %s52
      %p59 = scmp.eq.s32.totalorder %s21, 7
      %p60 = por %p58, %p59
      %p61 = scmp.ne.s32.totalorder %s52, %s53
      %p62 = scmp.eq.s32.totalorder %s21, 0
      %p63 = por %p61, %p62
      %p64 = scmp.ne.s32.totalorder %s52, %s53
      %p65 = scmp.eq.s32.totalorder %s22, 7
      %p66 = por %p64, %p65
      %p68 = scmp.ne.s32.totalorder %s53, %s67
      %p69 = scmp.eq.s32.totalorder %s22, 0
      %p70 = por %p68, %p69
      %s72 = sadd.s32 %s71, 1
      %p75 = scmp.eq.s32.totalorder %s16, 7
      %p76 = scmp.ne.s32.totalorder %s71, %s73
      %p77 = scmp.eq.s32.totalorder %s16, 0
      %p78 = por %p76, %p77
      %p79 = scmp.ne.s32.totalorder %s71, %s73
      %p80 = scmp.eq.s32.totalorder %s21, 7
      %p81 = por %p79, %p80
      %p82 = scmp.ne.s32.totalorder %s73, %s74
      %p83 = scmp.eq.s32.totalorder %s21, 0
      %p84 = por %p82, %p83
      %p85 = scmp.ne.s32.totalorder %s73, %s74
      %p86 = scmp.eq.s32.totalorder %s22, 7
      %p87 = por %p85, %p86
      %p89 = scmp.ne.s32.totalorder %s74, %s88
      %p90 = scmp.eq.s32.totalorder %s22, 0
      %p91 = por %p89, %p90
      %s92 = ssub.s32 %s16, %s23
      %p93 = scmp.eq.s32.totalorder %s92, 0
      %s95 = sadd.s32 %s94, 1
      %s96 = scalar_select %p93, %s94, %s95
      %p99 = pneg %p93
      %p100 = scmp.eq.s32.totalorder %s16, 7
      %p101 = por %p99, %p100
      %p102 = scmp.ne.s32.totalorder %s94, %s97
      %p103 = scmp.eq.s32.totalorder %s16, 0
      %p104 = por %p102, %p103
      %p105 = scmp.ne.s32.totalorder %s94, %s97
      %p106 = scmp.eq.s32.totalorder %s21, 7
      %p107 = por %p105, %p106
      %p108 = scmp.ne.s32.totalorder %s97, %s98
      %p109 = scmp.eq.s32.totalorder %s21, 0
      %p110 = por %p108, %p109
      %p111 = scmp.ne.s32.totalorder %s97, %s98
      %p112 = scmp.eq.s32.totalorder %s22, 7
      %p113 = por %p111, %p112
      %p115 = scmp.ne.s32.totalorder %s98, %s114
      %p116 = scmp.eq.s32.totalorder %s22, 0
      %p117 = por %p115, %p116
      %p118 = scmp.le.s32.totalorder 1, %s16
      %p119 = scmp.lt.s32.totalorder %s16, 9
      %p120 = pnand %p118, %p119
      %p121 = pneg %p120
      // Predicated region
      $region9: #{tpu_custom_call.1} parent=5 // pred_check
        _
      $region10: #{tpu_custom_call.1} parent=5 // pred_check_branch
        %123 = sbr.rel (%p120) target = $region12
      $region11: #{tpu_custom_call.1} parent=5 // pred_region
        %s124 = ssub.s32 %s16, 1
        // Predicated region
        $region13: #{tpu_custom_call.1} parent=11 // pred_check
          %p125 = pneg %p63
        $region14: #{tpu_custom_call.1} parent=11 // pred_check_branch
          %127 = sbr.rel (%p125) target = $region16
        $region15: #{tpu_custom_call.1} parent=11 // pred_region
          %s129 = ssub.s32 256, 256
          %130 = vsyncadd [#allocation6], %s129
          %s131 = sshll.u32 [#allocation5], 4
          %s132 = int_to_ptr.vmem [resolvable:$true] %s131
          %137 = dma.hbm_to_vmem [thread:$0]  %s1, 256, %s132, [#allocation6], 128, 128, 8
        $region16: #{tpu_custom_call.1} parent=11 // pred_fallthru
          _
        // Predicated region
        $region17: #{tpu_custom_call.1} parent=11 // pred_check
          %p138 = pneg %p84
        $region18: #{tpu_custom_call.1} parent=11 // pred_check_branch
          %140 = sbr.rel (%p138) target = $region20
        $region19: #{tpu_custom_call.1} parent=11 // pred_region
          %s142 = ssub.s32 256, 256
          %143 = vsyncadd [#allocation6], %s142
          %s144 = sshll.u32 [#allocation7], 4
          %s145 = int_to_ptr.vmem [resolvable:$true] %s144
          %150 = dma.hbm_to_vmem [thread:$0]  %s2, 256, %s145, [#allocation6], 128, 128, 8
        $region20: #{tpu_custom_call.1} parent=11 // pred_fallthru
          _
      $region12: #{tpu_custom_call.1} parent=5 // pred_fallthru
        _
      %p151 = scmp.lt.s32.totalorder %s16, 8
      // Predicated region
      $region21: #{tpu_custom_call.1} parent=5 // pred_check
        %p152 = pneg %p151
      $region22: #{tpu_custom_call.1} parent=5 // pred_check_branch
        %154 = sbr.rel (%p152) target = $region24
      $region23: #{tpu_custom_call.1} parent=5 // pred_region
        // Predicated region
        $region25: #{tpu_custom_call.1} parent=23 // pred_check
          %p155 = pneg %p36
        $region26: #{tpu_custom_call.1} parent=23 // pred_check_branch
          %157 = sbr.rel (%p155) target = $region28
        $region27: #{tpu_custom_call.1} parent=23 // pred_region
          %s158 = sand.u32 %s26, 1
          %s159 = scalar_lea.sflag [#allocation3], %s158
          %s160 = sand.u32 %s26, 1
          %s161 = smul.addr %s160, 16
          %s162 = scalar_lea.vmem [#allocation2], %s161
          %s164 = ssub.s32 256, 256
          %165 = vsyncadd %s159, %s164
          %s166 = smul.addr %s16, 2
          %s167 = smul.addr %s166, 128
          %s168 = scalar_lea.hbm %s0, %s167
          %s169 = sshll.u32 %s162, 4
          %s170 = int_to_ptr.vmem [resolvable:$true] %s169
          %175 = dma.hbm_to_vmem [thread:$0]  %s168, 256, %s170, %s159, 128, 128, 8
        $region28: #{tpu_custom_call.1} parent=23 // pred_fallthru
          _
      $region24: #{tpu_custom_call.1} parent=5 // pred_fallthru
        _
      %p176 = scmp.le.s32.totalorder 1, %s16
      %p177 = scmp.lt.s32.totalorder %s16, 9
      %p178 = pnand %p176, %p177
      %p179 = pneg %p178
      // Predicated region
      $region29: #{tpu_custom_call.1} parent=5 // pred_check
        _
      $region30: #{tpu_custom_call.1} parent=5 // pred_check_branch
        %181 = sbr.rel (%p178) target = $region32
      $region31: #{tpu_custom_call.1} parent=5 // pred_region
        %s182 = ssub.s32 %s16, 1
        %s183 = sand.u32 %s29, 1
        %s184 = scalar_lea.sflag [#allocation3], %s183
        %s185 = sand.u32 %s29, 1
        %s186 = smul.addr %s185, 16
        %s187 = scalar_lea.vmem [#allocation2], %s186
        // Predicated region
        $region33: #{tpu_custom_call.1} parent=31 // pred_check
          %p188 = pneg %p42
        $region34: #{tpu_custom_call.1} parent=31 // pred_check_branch
          %190 = sbr.rel (%p188) target = $region36
        $region35: #{tpu_custom_call.1} parent=31 // pred_region
          %191 = dma.done %s184, 256
        $region36: #{tpu_custom_call.1} parent=31 // pred_fallthru
          _
        // Predicated region
        $region37: #{tpu_custom_call.1} parent=31 // pred_check
          %p192 = pneg %p63
        $region38: #{tpu_custom_call.1} parent=31 // pred_check_branch
          %194 = sbr.rel (%p192) target = $region40
        $region39: #{tpu_custom_call.1} parent=31 // pred_region
          %195 = dma.done [#allocation6], 256
        $region40: #{tpu_custom_call.1} parent=31 // pred_fallthru
          _
        // Predicated region
        $region41: #{tpu_custom_call.1} parent=31 // pred_check
          %p196 = pneg %p84
        $region42: #{tpu_custom_call.1} parent=31 // pred_check_branch
          %198 = sbr.rel (%p196) target = $region44
        $region43: #{tpu_custom_call.1} parent=31 // pred_region
          %199 = dma.done [#allocation6], 256
        $region44: #{tpu_custom_call.1} parent=31 // pred_fallthru
          _
        %s200 = sand.u32 %s29, 1
        %s201 = scalar_lea.sflag [#allocation3], %s200
        %s202 = sand.u32 %s29, 1
        %s203 = smul.addr %s202, 16
        %s204 = scalar_lea.vmem [#allocation2], %s203
        %p205 = pneg %p42
        %p206 = pneg %p39
        %p207 = pneg %p63
        %p208 = pneg %p60
        %p209 = pneg %p84
        %p210 = pneg %p81
        %p211 = pneg %p110
        %p212 = pneg %p107
        %s213 = sand.u32 %s97, 1
        %s214 = scalar_lea.sflag [#allocation4], %s213
        %s215 = sand.u32 %s97, 1
        %s216 = smul.addr %s215, 16
        %s217 = scalar_lea.vmem [#allocation8], %s216
        %v218 = vld [vmem:[%s187] sm:$0xff]
        %v219 = vld [vmem:[%s187 + $0x8] sm:$0xff]
        %v220 = vld [vmem:[#allocation7] sm:$0xff]
        %v221 = vld [vmem:[#allocation7 + $0x8] sm:$0xff]
        %vm222 = vcmask 130048
        %v224 = vsel %vm222, %v218, 0
        %v227 = vsel %vm222, %v219, 0
        %229 = vmatprep.subr.mxu0 0.0
        %230 = vmatpush1.msra.mxu0 %v220
        %231 = vmatprep.subr.mxu0 0.0
        %232 = vmatpush1.msra.mxu0 %v221
        %233 = vmatprep.subr.mxu0 0.0
        %234 = vmatpush1.msra.mxu0 0.0
        %235 = vmatprep.subr.mxu0 0.0
        %236 = vmatpush1.msra.mxu0 0.0
        %237 = vmatprep.subr.mxu0 0.0
        %238 = vmatpush1.msra.mxu0 0.0
        %239 = vmatprep.subr.mxu0 0.0
        %240 = vmatpush1.msra.mxu0 0.0
        %241 = vmatprep.subr.mxu0 0.0
        %242 = vmatpush1.msra.mxu0 0.0
        %243 = vmatprep.subr.mxu0 0.0
        %244 = vmatpush1.msra.mxu0 0.0
        %245 = vmatprep.subr.mxu0 0.0
        %246 = vmatpush1.msra.mxu0 0.0
        %247 = vmatprep.subr.mxu0 0.0
        %248 = vmatpush1.msra.mxu0 0.0
        %249 = vmatprep.subr.mxu0 0.0
        %250 = vmatpush1.msra.mxu0 0.0
        %251 = vmatprep.subr.mxu0 0.0
        %252 = vmatpush1.msra.mxu0 0.0
        %253 = vmatprep.subr.mxu0 0.0
        %254 = vmatpush1.msra.mxu0 0.0
        %255 = vmatprep.subr.mxu0 0.0
        %256 = vmatpush1.msra.mxu0 0.0
        %257 = vmatprep.subr.mxu0 0.0
        %258 = vmatpush1.msra.mxu0 0.0
        %259 = vmatprep.subr.mxu0 0.0
        %260 = vmatpush1.msra.mxu0 0.0
        %261 = vmatprep.subr.mxu0 0.0
        %262 = vmatpush1.msra.mxu0 0.0
        %263 = vmatprep.subr.mxu0 0.0
        %264 = vmatpush1.msra.mxu0 0.0
        %265 = vmatprep.subr.mxu0 0.0
        %266 = vmatpush1.msra.mxu0 0.0
        %267 = vmatprep.subr.mxu0 0.0
        %268 = vmatpush1.msra.mxu0 0.0
        %269 = vmatprep.subr.mxu0 0.0
        %270 = vmatpush1.msra.mxu0 0.0
        %271 = vmatprep.subr.mxu0 0.0
        %272 = vmatpush1.msra.mxu0 0.0
        %273 = vmatprep.subr.mxu0 0.0
        %274 = vmatpush1.msra.mxu0 0.0
        %275 = vmatprep.subr.mxu0 0.0
        %276 = vmatpush1.msra.mxu0 0.0
        %277 = vmatprep.subr.mxu0 0.0
        %278 = vmatpush1.msra.mxu0 0.0
        %279 = vmatprep.subr.mxu0 0.0
        %280 = vmatpush1.msra.mxu0 0.0
        %281 = vmatprep.subr.mxu0 0.0
        %282 = vmatpush1.msra.mxu0 0.0
        %283 = vmatprep.subr.mxu0 0.0
        %284 = vmatpush1.msra.mxu0 0.0
        %285 = vmatprep.subr.mxu0 0.0
        %286 = vmatpush1.msra.mxu0 0.0
        %287 = vmatprep.subr.mxu0 0.0
        %288 = vmatpush1.msra.mxu0 0.0
        %289 = vmatprep.subr.mxu0 0.0
        %290 = vmatpush1.msra.mxu0 0.0
        %291 = vmatprep.subr.mxu0 0.0
        %292 = vmatpush1.msra.mxu0 0.0
        %293 = vmatprep.mubr.f32.mxu0 0.0
        %294 = vmatmul.mubr.f32.gmra.mrb[0].mxu0 %v224
        %v295 = vpop.f32.mrb[0].mxu0
        %v296 = vadd.f32 0.0, %v295
        %v297 = vpop.f32.mrb[0].mxu0
        %298 = vmatprep.mubr.f32.mxu0 0.0
        %299 = vmatmul.mubr.f32.gmra.mrb[0].mxu0 %v227
        %v300 = vpop.f32.mrb[0].mxu0
        %v301 = vadd.f32 0.0, %v300
        %v302 = vpop.f32.mrb[0].mxu0
        %303 = vdwg.mxu0
        %v304 = vld [vmem:[#allocation5] sm:$0xff]
        %v305 = vld [vmem:[#allocation5 + $0x8] sm:$0xff]
        %v307 = vsel %vm222, %v304, 0
        %v310 = vsel %vm222, %v305, 0
        %312 = vmatprep.subr.mxu0 0.0
        %313 = vmatpush1.msra.mxu0 %v296
        %314 = vmatprep.subr.mxu0 0.0
        %315 = vmatpush1.msra.mxu0 %v301
        %316 = vmatprep.subr.mxu0 0.0
        %317 = vmatpush1.msra.mxu0 0.0
        %318 = vmatprep.subr.mxu0 0.0
        %319 = vmatpush1.msra.mxu0 0.0
        %320 = vmatprep.subr.mxu0 0.0
        %321 = vmatpush1.msra.mxu0 0.0
        %322 = vmatprep.subr.mxu0 0.0
        %323 = vmatpush1.msra.mxu0 0.0
        %324 = vmatprep.subr.mxu0 0.0
        %325 = vmatpush1.msra.mxu0 0.0
        %326 = vmatprep.subr.mxu0 0.0
        %327 = vmatpush1.msra.mxu0 0.0
        %328 = vmatprep.subr.mxu0 0.0
        %329 = vmatpush1.msra.mxu0 0.0
        %330 = vmatprep.subr.mxu0 0.0
        %331 = vmatpush1.msra.mxu0 0.0
        %332 = vmatprep.subr.mxu0 0.0
        %333 = vmatpush1.msra.mxu0 0.0
        %334 = vmatprep.subr.mxu0 0.0
        %335 = vmatpush1.msra.mxu0 0.0
        %336 = vmatprep.subr.mxu0 0.0
        %337 = vmatpush1.msra.mxu0 0.0
        %338 = vmatprep.subr.mxu0 0.0
        %339 = vmatpush1.msra.mxu0 0.0
        %340 = vmatprep.subr.mxu0 0.0
        %341 = vmatpush1.msra.mxu0 0.0
        %342 = vmatprep.subr.mxu0 0.0
        %343 = vmatpush1.msra.mxu0 0.0
        %344 = vmatprep.subr.mxu0 0.0
        %345 = vmatpush1.msra.mxu0 0.0
        %346 = vmatprep.subr.mxu0 0.0
        %347 = vmatpush1.msra.mxu0 0.0
        %348 = vmatprep.subr.mxu0 0.0
        %349 = vmatpush1.msra.mxu0 0.0
        %350 = vmatprep.subr.mxu0 0.0
        %351 = vmatpush1.msra.mxu0 0.0
        %352 = vmatprep.subr.mxu0 0.0
        %353 = vmatpush1.msra.mxu0 0.0
        %354 = vmatprep.subr.mxu0 0.0
        %355 = vmatpush1.msra.mxu0 0.0
        %356 = vmatprep.subr.mxu0 0.0
        %357 = vmatpush1.msra.mxu0 0.0
        %358 = vmatprep.subr.mxu0 0.0
        %359 = vmatpush1.msra.mxu0 0.0
        %360 = vmatprep.subr.mxu0 0.0
        %361 = vmatpush1.msra.mxu0 0.0
        %362 = vmatprep.subr.mxu0 0.0
        %363 = vmatpush1.msra.mxu0 0.0
        %364 = vmatprep.subr.mxu0 0.0
        %365 = vmatpush1.msra.mxu0 0.0
        %366 = vmatprep.subr.mxu0 0.0
        %367 = vmatpush1.msra.mxu0 0.0
        %368 = vmatprep.subr.mxu0 0.0
        %369 = vmatpush1.msra.mxu0 0.0
        %370 = vmatprep.subr.mxu0 0.0
        %371 = vmatpush1.msra.mxu0 0.0
        %372 = vmatprep.subr.mxu0 0.0
        %373 = vmatpush1.msra.mxu0 0.0
        %374 = vmatprep.subr.mxu0 0.0
        %375 = vmatpush1.msra.mxu0 0.0
        %376 = vmatprep.mubr.f32.mxu0 0.0
        %377 = vmatmul.mubr.f32.gmra.mrb[0].mxu0 %v307
        %v378 = vpop.f32.mrb[0].mxu0
        %v379 = vadd.f32 0.0, %v378
        %v380 = vpop.f32.mrb[0].mxu0
        %381 = vmatprep.mubr.f32.mxu0 0.0
        %382 = vmatmul.mubr.f32.gmra.mrb[0].mxu0 %v310
        %v383 = vpop.f32.mrb[0].mxu0
        %v384 = vadd.f32 0.0, %v383
        %v385 = vpop.f32.mrb[0].mxu0
        %386 = vdwg.mxu0
        %387 = vst.msk [vmem:[%s217] sm:$0xff] %vm222, %v379
        %388 = vst.msk [vmem:[%s217 + $0x8] sm:$0xff] %vm222, %v384
        %s389 = sand.u32 %s97, 1
        %s390 = scalar_lea.sflag [#allocation4], %s389
        %s391 = sand.u32 %s97, 1
        %s392 = smul.addr %s391, 16
        %s393 = scalar_lea.vmem [#allocation8], %s392
        // Predicated region
        $region45: #{tpu_custom_call.1} parent=31 // pred_check
          %p394 = pneg %p107
        $region46: #{tpu_custom_call.1} parent=31 // pred_check_branch
          %396 = sbr.rel (%p394) target = $region48
        $region47: #{tpu_custom_call.1} parent=31 // pred_region
          %s398 = ssub.s32 256, 256
          %399 = vsyncadd %s390, %s398
          %s400 = smul.addr %s21, 2
          %s401 = smul.addr %s400, 128
          %s402 = scalar_lea.hbm %s3, %s401
          %s403 = sshll.u32 %s393, 4
          %s404 = int_to_ptr.vmem [resolvable:$true] %s403
          %409 = dma.vmem_to_hbm [thread:$0]  %s404, 256, %s402, %s390, 128, 128, 8
        $region48: #{tpu_custom_call.1} parent=31 // pred_fallthru
          _
      $region32: #{tpu_custom_call.1} parent=5 // pred_fallthru
        _
      %p410 = scmp.le.s32.totalorder 2, %s16
      // Predicated region
      $region49: #{tpu_custom_call.1} parent=5 // pred_check
        %p411 = pneg %p410
      $region50: #{tpu_custom_call.1} parent=5 // pred_check_branch
        %413 = sbr.rel (%p411) target = $region52
      $region51: #{tpu_custom_call.1} parent=5 // pred_region
        %s414 = ssub.s32 %s16, 2
        // Predicated region
        $region53: #{tpu_custom_call.1} parent=51 // pred_check
          %p415 = pneg %p113
        $region54: #{tpu_custom_call.1} parent=51 // pred_check_branch
          %417 = sbr.rel (%p415) target = $region56
        $region55: #{tpu_custom_call.1} parent=51 // pred_region
          %s418 = sand.u32 %s98, 1
          %s419 = scalar_lea.sflag [#allocation4], %s418
          %s420 = sand.u32 %s98, 1
          %s421 = smul.addr %s420, 16
          %s422 = scalar_lea.vmem [#allocation8], %s421
          %423 = dma.done %s419, 256
        $region56: #{tpu_custom_call.1} parent=51 // pred_fallthru
          _
      $region52: #{tpu_custom_call.1} parent=5 // pred_fallthru
        _
    $region6: #{tpu_custom_call.1} parent=1 // loop_footer
      %s20 = sadd.s32 1, %s16
    $region7: #{tpu_custom_call.1} parent=1 // loop_footer_branch
      %15 = sbr.rel target = $region3
    $region8: #{tpu_custom_call.1} parent=1 // loop_exit
      _
    %424 = vsyncpa [#allocation3], 1
    %s425 = scalar_lea.sflag [#allocation3], 1
    %426 = vsyncpa %s425, 1
    %427 = vsyncpa [#allocation6], 1
    %428 = vsyncpa [#allocation4], 1
    %s429 = scalar_lea.sflag [#allocation4], 1
    %430 = vsyncpa %s429, 1

</llo_original>
